<compile_context>
chip_gen: v7x
topology: tpu7x:2x2x1
jax: 0.10.0
libtpu: 0.0.40
codegen_flags: <defaults>
</compile_context>

<pallas_src>
import functools

import jax
import jax.numpy as jnp
from jax.experimental import pallas as pl
from jax.experimental.pallas import tpu as pltpu


def _pick_tile(n, target):
    """Largest tile <= target that divides n and keeps the sublane dim 8-aligned."""
    if n <= target:
        return n
    for t in range(target, 0, -1):
        if n % t == 0 and t % 8 == 0:
            return t
    return n


def _vmem_limit_bytes():
    """Per-generation VMEM budget: physical capacity minus headroom, capped at 112 MiB."""
    mib = 1024 * 1024
    try:
        cap = getattr(pltpu.get_tpu_info(), "vmem_capacity_bytes", 64 * mib)
    except Exception:
        cap = 64 * mib
    return int(min(112 * mib, max(32 * mib, cap - 8 * mib)))


def _weight_spec(shape, single_buffer):
    """Grid-invariant weight BlockSpec; single-buffered when supported (saves one full copy)."""
    index_map = lambda *_: (0,) * len(shape)
    if single_buffer:
        try:
            return pl.BlockSpec(shape, index_map, pipeline_mode=pl.Buffered(1))
        except TypeError:  # older jax without pipeline_mode on BlockSpec
            pass
    return pl.BlockSpec(shape, index_map)


def qkv_proj_kernel(x_ref, w_qkv_ref, q_ref, k_ref, v_ref, *, scale):
    """Fused QKV projection for one (1, tn, C) x-tile; q pre-scaled; bf16 outputs."""
    x = x_ref[0]                    # (tn, C)  bf16
    w = w_qkv_ref[...]              # (C, 3C)  bf16
    c = w_qkv_ref.shape[0]
    qkv = jnp.dot(x, w, preferred_element_type=jnp.float32)        # (tn, 3C) f32
    q_ref[0] = (qkv[:, :c] * scale).astype(q_ref.dtype)            # scale folded into q
    k_ref[0] = qkv[:, c:2 * c].astype(k_ref.dtype)
    v_ref[0] = qkv[:, 2 * c:].astype(v_ref.dtype)


def flash_attn_kernel(q_ref, k_ref, v_ref, w_proj_ref, o_ref,
                      m_ref, l_ref, acc_ref, *, num_heads):
    """One (batch, q-tile, kv-tile) step of online-softmax attention + output projection.

    Scratch (persistent across the kv grid axis for a given (b, q-tile)):
      m_ref   (tq, H)  f32  running row max per head
      l_ref   (tq, H)  f32  running row sum per head
      acc_ref (tq, C)  f32  unnormalized P @ V, heads concatenated along columns
    """
    ki = pl.program_id(2)

    @pl.when(ki == 0)
    def _init():
        m_ref[...] = jnp.full_like(m_ref, -jnp.inf)
        l_ref[...] = jnp.zeros_like(l_ref)
        acc_ref[...] = jnp.zeros_like(acc_ref)

    q = q_ref[0]                    # (tq, C) bf16, already scaled by head_dim**-0.5
    k = k_ref[0]                    # (tk, C) bf16
    v = v_ref[0]                    # (tk, C) bf16
    c = q.shape[-1]
    hd = c // num_heads

    # Static per-head loop: with flash tiling each head only keeps a (tq, tk) score
    # tile live, so the unrolled working set stays bounded.
    # TODO(synk): move heads onto the grid (per-head weight blocks) once hd-wide
    #             (sub-128-lane) weight BlockSpecs are worthwhile on the target gen.
    for h in range(num_heads):
        lo = h * hd
        q_h = q[:, lo:lo + hd]                                      # (tq, hd) bf16
        k_h = k[:, lo:lo + hd]                                      # (tk, hd) bf16
        v_h = v[:, lo:lo + hd]                                      # (tk, hd) bf16

        # Scores: contract hd without materializing k^T; f32 accumulation on the MXU.
        s = jax.lax.dot_general(q_h, k_h, (((1,), (1,)), ((), ())),
                                preferred_element_type=jnp.float32)  # (tq, tk) f32

        m_prev = m_ref[:, h:h + 1]                                   # (tq, 1)
        m_new = jnp.maximum(m_prev, jnp.max(s, axis=-1, keepdims=True))
        alpha = jnp.exp(m_prev - m_new)                              # (tq, 1) f32
        p = jnp.exp(s - m_new)                                       # (tq, tk) f32 (EUP)

        l_ref[:, h:h + 1] = alpha * l_ref[:, h:h + 1] + jnp.sum(p, axis=-1, keepdims=True)
        pv = jnp.dot(p.astype(jnp.bfloat16), v_h,
                     preferred_element_type=jnp.float32)             # (tq, hd) f32
        acc_ref[:, lo:lo + hd] = alpha * acc_ref[:, lo:lo + hd] + pv
        m_ref[:, h:h + 1] = m_new

    @pl.when(ki == pl.num_programs(2) - 1)
    def _finalize():
        # Normalize AFTER the PV matmul: N*hd multiplies per head instead of N*N.
        for h in range(num_heads):
            lo = h * hd
            inv = pl.reciprocal(l_ref[:, h:h + 1], approx=True)      # EUP; ~1e-3 rel err
            acc_ref[:, lo:lo + hd] = acc_ref[:, lo:lo + hd] * inv
        # Single lane-dense output projection on the concatenated heads.
        # attn_drop / proj_drop are p=0 -> identity.
        out = jnp.dot(acc_ref[...].astype(jnp.bfloat16), w_proj_ref[...],
                      preferred_element_type=jnp.float32)            # (tq, C) f32
        o_ref[0] = out.astype(o_ref.dtype)


def _old_attention_impl(x, w_qkv, w_proj, num_heads, *, single_buffer_weights,
                        compute_dtype=jnp.bfloat16, tq_target=256, tk_target=512):
    B, N, C = x.shape
    assert C % num_heads == 0, "num_heads must divide C"
    hd = C // num_heads
    scale = hd ** (-0.5)
    vmem_limit = _vmem_limit_bytes()

    # ---- 1) fused QKV projection: bf16 q/k/v activations, q pre-scaled --------------
    tn = _pick_tile(N, tq_target)
    q, k, v = pl.pallas_call(
        functools.partial(qkv_proj_kernel, scale=scale),
        out_shape=tuple(jax.ShapeDtypeStruct((B, N, C), compute_dtype) for _ in range(3)),
        grid_spec=pltpu.PrefetchScalarGridSpec(
            num_scalar_prefetch=0,
            grid=(B, N // tn),
            in_specs=[
                pl.BlockSpec((1, tn, C), lambda b, i: (b, i, 0)),
                _weight_spec((C, 3 * C), single_buffer_weights),
            ],
            out_specs=[pl.BlockSpec((1, tn, C), lambda b, i: (b, i, 0)) for _ in range(3)],
        ),
        compiler_params=pltpu.CompilerParams(
            dimension_semantics=("parallel", "parallel"),
            vmem_limit_bytes=vmem_limit,
        ),
    )(x.astype(compute_dtype), w_qkv.astype(compute_dtype))

    # ---- 2) flash attention + fused output projection --------------------------------
    # Tiles divide N exactly (no partial-kv masking needed). q-tiles provide a second
    # "parallel" axis so both v7x TensorCores have work even when B == 1.
    tq = _pick_tile(N, tq_target)
    tk = _pick_tile(N, tk_target)
    out = pl.pallas_call(
        functools.partial(flash_attn_kernel, num_heads=num_heads),
        out_shape=jax.ShapeDtypeStruct((B, N, C), x.dtype),
        grid_spec=pltpu.PrefetchScalarGridSpec(
            num_scalar_prefetch=0,
            grid=(B, N // tq, N // tk),
            in_specs=[
                pl.BlockSpec((1, tq, C), lambda b, qi, ki: (b, qi, 0)),
                pl.BlockSpec((1, tk, C), lambda b, qi, ki: (b, ki, 0)),
                pl.BlockSpec((1, tk, C), lambda b, qi, ki: (b, ki, 0)),
                _weight_spec((C, C), single_buffer_weights),
            ],
            out_specs=pl.BlockSpec((1, tq, C), lambda b, qi, ki: (b, qi, 0)),
            scratch_shapes=[
                pltpu.VMEM((tq, num_heads), jnp.float32),   # m: running max per head
                pltpu.VMEM((tq, num_heads), jnp.float32),   # l: running sum per head
                pltpu.VMEM((tq, C), jnp.float32),           # acc: heads concatenated
            ],
        ),
        compiler_params=pltpu.CompilerParams(
            dimension_semantics=("parallel", "parallel", "arbitrary"),
            vmem_limit_bytes=vmem_limit,
        ),
    )(q, k, v, w_proj.astype(compute_dtype))
    return out


def old_attention_pallas(x, w_qkv, w_proj, num_heads, **kwargs):
    try:
        out = _old_attention_impl(x, w_qkv, w_proj, num_heads,
                                  single_buffer_weights=True, **kwargs)
        return jax.block_until_ready(out)
    except Exception:
        # Fallback for jax versions where single-buffered (pl.Buffered(1)) weight
        # BlockSpecs are not supported; semantics are identical.
        out = _old_attention_impl(x, w_qkv, w_proj, num_heads,
                                  single_buffer_weights=False, **kwargs)
        return jax.block_until_ready(out)


def old_attention_ref(x, w_qkv, w_proj, num_heads):
    """Pure-JAX f32 reference mirroring the PyTorch forward."""
    B, N, C = x.shape
    hd = C // num_heads
    scale = hd ** (-0.5)
    qkv = x @ w_qkv                                        # (B, N, 3C)
    qkv = qkv.reshape(B, N, 3, num_heads, hd).transpose(2, 0, 3, 1, 4)
    q, k, v = qkv[0], qkv[1], qkv[2]                       # (B, H, N, hd)
    attn = (q @ jnp.swapaxes(k, -2, -1)) * scale           # (B, H, N, N)
    attn = jax.nn.softmax(attn, axis=-1)
    out = (attn @ v).transpose(0, 2, 1, 3).reshape(B, N, C)
    return out @ w_proj


if __name__ == "__main__":
    B, N, C, num_heads = 2, 8, 32, 8

    key = jax.random.PRNGKey(0)
    kx, kqkv, kproj = jax.random.split(key, 3)
    x = jax.random.normal(kx, (B, N, C), dtype=jnp.float32)
    w_qkv = 0.05 * jax.random.normal(kqkv, (C, 3 * C), dtype=jnp.float32)
    w_proj = 0.05 * jax.random.normal(kproj, (C, C), dtype=jnp.float32)

    out = old_attention_pallas(x, w_qkv, w_proj, num_heads)
    out = jax.block_until_ready(out)

    ref = old_attention_ref(x, w_qkv, w_proj, num_heads)
    assert out.shape == (B, N, C)
    # bf16 matmul operands + approx reciprocal vs. f32 reference -> loose tolerance.
    assert jnp.allclose(out, ref, atol=2e-2, rtol=2e-2), "mismatch vs reference"

    print("KERNEL_OK")
</pallas_src>

<mosaic_0001>
module attributes {stable_mosaic.version = 11 : i64} {
  func.func @qkv_proj_kernel(%arg0: i32, %arg1: i32, %arg2: memref<1x8x32xbf16, #tpu.memory_space<vmem>>, %arg3: memref<32x96xbf16, #tpu.memory_space<vmem>>, %arg4: memref<1x8x32xbf16, #tpu.memory_space<vmem>>, %arg5: memref<1x8x32xbf16, #tpu.memory_space<vmem>>, %arg6: memref<1x8x32xbf16, #tpu.memory_space<vmem>>) attributes {dimension_semantics = [#tpu.dimension_semantics<parallel>, #tpu.dimension_semantics<parallel>], iteration_bounds = array<i64: 2, 1>, scalar_prefetch = 0 : i64, scratch_operands = 0 : i64, tpu.core_type = #tpu.core_type<tc>, window_params = [{transform_indices = @transform_0, window_bounds = array<i64: 1, 8, 32>}, {pipeline_mode = #tpu.pipeline_mode<synchronous>, transform_indices = @transform_1, window_bounds = array<i64: 32, 96>}, {transform_indices = @transform_2, window_bounds = array<i64: 1, 8, 32>}, {transform_indices = @transform_3, window_bounds = array<i64: 1, 8, 32>}, {transform_indices = @transform_4, window_bounds = array<i64: 1, 8, 32>}]} {
    %c0 = arith.constant 0 : index
    %c0_0 = arith.constant 0 : index
    %c0_1 = arith.constant 0 : index
    %0 = vector.load %arg2[%c0, %c0_0, %c0_1] : memref<1x8x32xbf16, #tpu.memory_space<vmem>>, vector<1x8x32xbf16>
    %1 = vector.shape_cast %0 : vector<1x8x32xbf16> to vector<8x32xbf16>
    %c0_2 = arith.constant 0 : index
    %c0_3 = arith.constant 0 : index
    %2 = vector.load %arg3[%c0_2, %c0_3] : memref<32x96xbf16, #tpu.memory_space<vmem>>, vector<32x96xbf16>
    %cst = arith.constant dense<0.000000e+00> : vector<8x96xf32>
    %3 = tpu.matmul %1, %2, %cst {dimension_numbers = #tpu.dot_dimension_numbers<[1], [0], [0], [1], [0, 0, 1, 1], [], []>} : vector<8x32xbf16>, vector<32x96xbf16>, vector<8x96xf32> -> vector<8x96xf32>
    %4 = vector.extract_strided_slice %3 {offsets = [0, 0], sizes = [8, 32], strides = [1, 1]} : vector<8x96xf32> to vector<8x32xf32>
    %cst_4 = arith.constant 5.000000e-01 : f32
    %5 = vector.broadcast %cst_4 : f32 to vector<8x32xf32>
    %6 = arith.mulf %4, %5 : vector<8x32xf32>
    %7 = arith.truncf %6 : vector<8x32xf32> to vector<8x32xbf16>
    %c0_5 = arith.constant 0 : index
    %c0_6 = arith.constant 0 : index
    %c0_7 = arith.constant 0 : index
    %8 = vector.load %arg4[%c0_5, %c0_6, %c0_7] : memref<1x8x32xbf16, #tpu.memory_space<vmem>>, vector<1x8x32xbf16>
    %9 = vector.shape_cast %8 : vector<1x8x32xbf16> to vector<8x32xbf16>
    %10 = vector.shape_cast %7 : vector<8x32xbf16> to vector<1x8x32xbf16>
    tpu.vector_store %arg4[%c0_5, %c0_6, %c0_7], %10 {strides = array<i32>} : memref<1x8x32xbf16, #tpu.memory_space<vmem>>, vector<1x8x32xbf16>,
    %11 = vector.extract_strided_slice %3 {offsets = [0, 32], sizes = [8, 32], strides = [1, 1]} : vector<8x96xf32> to vector<8x32xf32>
    %12 = arith.truncf %11 : vector<8x32xf32> to vector<8x32xbf16>
    %c0_8 = arith.constant 0 : index
    %c0_9 = arith.constant 0 : index
    %c0_10 = arith.constant 0 : index
    %13 = vector.load %arg5[%c0_8, %c0_9, %c0_10] : memref<1x8x32xbf16, #tpu.memory_space<vmem>>, vector<1x8x32xbf16>
    %14 = vector.shape_cast %13 : vector<1x8x32xbf16> to vector<8x32xbf16>
    %15 = vector.shape_cast %12 : vector<8x32xbf16> to vector<1x8x32xbf16>
    tpu.vector_store %arg5[%c0_8, %c0_9, %c0_10], %15 {strides = array<i32>} : memref<1x8x32xbf16, #tpu.memory_space<vmem>>, vector<1x8x32xbf16>,
    %16 = vector.extract_strided_slice %3 {offsets = [0, 64], sizes = [8, 32], strides = [1, 1]} : vector<8x96xf32> to vector<8x32xf32>
    %17 = arith.truncf %16 : vector<8x32xf32> to vector<8x32xbf16>
    %c0_11 = arith.constant 0 : index
    %c0_12 = arith.constant 0 : index
    %c0_13 = arith.constant 0 : index
    %18 = vector.load %arg6[%c0_11, %c0_12, %c0_13] : memref<1x8x32xbf16, #tpu.memory_space<vmem>>, vector<1x8x32xbf16>
    %19 = vector.shape_cast %18 : vector<1x8x32xbf16> to vector<8x32xbf16>
    %20 = vector.shape_cast %17 : vector<8x32xbf16> to vector<1x8x32xbf16>
    tpu.vector_store %arg6[%c0_11, %c0_12, %c0_13], %20 {strides = array<i32>} : memref<1x8x32xbf16, #tpu.memory_space<vmem>>, vector<1x8x32xbf16>,
    return
  }
  func.func @transform_0(%arg0: i32, %arg1: i32) -> (i32, i32, i32) {
    %c0_i32 = arith.constant 0 : i32
    %c0_i32_0 = arith.constant 0 : i32
    return %arg0, %arg1, %c0_i32 : i32, i32, i32
  }
  func.func @transform_1(%arg0: i32, %arg1: i32) -> (i32, i32) {
    %c0_i32 = arith.constant 0 : i32
    %c0_i32_0 = arith.constant 0 : i32
    %c0_i32_1 = arith.constant 0 : i32
    return %c0_i32, %c0_i32_0 : i32, i32
  }
  func.func @transform_2(%arg0: i32, %arg1: i32) -> (i32, i32, i32) {
    %c0_i32 = arith.constant 0 : i32
    %c0_i32_0 = arith.constant 0 : i32
    return %arg0, %arg1, %c0_i32 : i32, i32, i32
  }
  func.func @transform_3(%arg0: i32, %arg1: i32) -> (i32, i32, i32) {
    %c0_i32 = arith.constant 0 : i32
    %c0_i32_0 = arith.constant 0 : i32
    return %arg0, %arg1, %c0_i32 : i32, i32, i32
  }
  func.func @transform_4(%arg0: i32, %arg1: i32) -> (i32, i32, i32) {
    %c0_i32 = arith.constant 0 : i32
    %c0_i32_0 = arith.constant 0 : i32
    return %arg0, %arg1, %c0_i32 : i32, i32, i32
  }
}

module attributes {stable_mosaic.version = 11 : i64} {
  func.func @qkv_proj_kernel(%arg0: i32, %arg1: i32, %arg2: memref<1x8x32xbf16, #tpu.memory_space<vmem>>, %arg3: memref<32x96xbf16, #tpu.memory_space<vmem>>, %arg4: memref<1x8x32xbf16, #tpu.memory_space<vmem>>, %arg5: memref<1x8x32xbf16, #tpu.memory_space<vmem>>, %arg6: memref<1x8x32xbf16, #tpu.memory_space<vmem>>) attributes {dimension_semantics = [#tpu.dimension_semantics<parallel>, #tpu.dimension_semantics<parallel>], iteration_bounds = array<i64: 2, 1>, scalar_prefetch = 0 : i64, scratch_operands = 0 : i64, tpu.core_type = #tpu.core_type<tc>, window_params = [{transform_indices = @transform_0, window_bounds = array<i64: 1, 8, 32>}, {pipeline_mode = #tpu.pipeline_mode<synchronous>, transform_indices = @transform_1, window_bounds = array<i64: 32, 96>}, {transform_indices = @transform_2, window_bounds = array<i64: 1, 8, 32>}, {transform_indices = @transform_3, window_bounds = array<i64: 1, 8, 32>}, {transform_indices = @transform_4, window_bounds = array<i64: 1, 8, 32>}]} {
    %c0 = arith.constant 0 : index
    %c0_0 = arith.constant 0 : index
    %c0_1 = arith.constant 0 : index
    %0 = vector.load %arg2[%c0, %c0_0, %c0_1] : memref<1x8x32xbf16, #tpu.memory_space<vmem>>, vector<1x8x32xbf16>
    %1 = vector.shape_cast %0 : vector<1x8x32xbf16> to vector<8x32xbf16>
    %c0_2 = arith.constant 0 : index
    %c0_3 = arith.constant 0 : index
    %2 = vector.load %arg3[%c0_2, %c0_3] : memref<32x96xbf16, #tpu.memory_space<vmem>>, vector<32x96xbf16>
    %cst = arith.constant dense<0.000000e+00> : vector<8x96xf32>
    %3 = tpu.matmul %1, %2, %cst {dimension_numbers = #tpu.dot_dimension_numbers<[1], [0], [0], [1], [0, 0, 1, 1], [], []>} : vector<8x32xbf16>, vector<32x96xbf16>, vector<8x96xf32> -> vector<8x96xf32>
    %4 = vector.extract_strided_slice %3 {offsets = [0, 0], sizes = [8, 32], strides = [1, 1]} : vector<8x96xf32> to vector<8x32xf32>
    %cst_4 = arith.constant 5.000000e-01 : f32
    %5 = vector.broadcast %cst_4 : f32 to vector<8x32xf32>
    %6 = arith.mulf %4, %5 : vector<8x32xf32>
    %7 = arith.truncf %6 : vector<8x32xf32> to vector<8x32xbf16>
    %c0_5 = arith.constant 0 : index
    %c0_6 = arith.constant 0 : index
    %c0_7 = arith.constant 0 : index
    %8 = vector.load %arg4[%c0_5, %c0_6, %c0_7] : memref<1x8x32xbf16, #tpu.memory_space<vmem>>, vector<1x8x32xbf16>
    %9 = vector.shape_cast %8 : vector<1x8x32xbf16> to vector<8x32xbf16>
    %10 = vector.shape_cast %7 : vector<8x32xbf16> to vector<1x8x32xbf16>
    tpu.vector_store %arg4[%c0_5, %c0_6, %c0_7], %10 {strides = array<i32>} : memref<1x8x32xbf16, #tpu.memory_space<vmem>>, vector<1x8x32xbf16>,
    %11 = vector.extract_strided_slice %3 {offsets = [0, 32], sizes = [8, 32], strides = [1, 1]} : vector<8x96xf32> to vector<8x32xf32>
    %12 = arith.truncf %11 : vector<8x32xf32> to vector<8x32xbf16>
    %c0_8 = arith.constant 0 : index
    %c0_9 = arith.constant 0 : index
    %c0_10 = arith.constant 0 : index
    %13 = vector.load %arg5[%c0_8, %c0_9, %c0_10] : memref<1x8x32xbf16, #tpu.memory_space<vmem>>, vector<1x8x32xbf16>
    %14 = vector.shape_cast %13 : vector<1x8x32xbf16> to vector<8x32xbf16>
    %15 = vector.shape_cast %12 : vector<8x32xbf16> to vector<1x8x32xbf16>
    tpu.vector_store %arg5[%c0_8, %c0_9, %c0_10], %15 {strides = array<i32>} : memref<1x8x32xbf16, #tpu.memory_space<vmem>>, vector<1x8x32xbf16>,
    %16 = vector.extract_strided_slice %3 {offsets = [0, 64], sizes = [8, 32], strides = [1, 1]} : vector<8x96xf32> to vector<8x32xf32>
    %17 = arith.truncf %16 : vector<8x32xf32> to vector<8x32xbf16>
    %c0_11 = arith.constant 0 : index
    %c0_12 = arith.constant 0 : index
    %c0_13 = arith.constant 0 : index
    %18 = vector.load %arg6[%c0_11, %c0_12, %c0_13] : memref<1x8x32xbf16, #tpu.memory_space<vmem>>, vector<1x8x32xbf16>
    %19 = vector.shape_cast %18 : vector<1x8x32xbf16> to vector<8x32xbf16>
    %20 = vector.shape_cast %17 : vector<8x32xbf16> to vector<1x8x32xbf16>
    tpu.vector_store %arg6[%c0_11, %c0_12, %c0_13], %20 {strides = array<i32>} : memref<1x8x32xbf16, #tpu.memory_space<vmem>>, vector<1x8x32xbf16>,
    return
  }
  func.func @transform_0(%arg0: i32, %arg1: i32) -> (i32, i32, i32) {
    %c0_i32 = arith.constant 0 : i32
    %c0_i32_0 = arith.constant 0 : i32
    return %arg0, %arg1, %c0_i32 : i32, i32, i32
  }
  func.func @transform_1(%arg0: i32, %arg1: i32) -> (i32, i32) {
    %c0_i32 = arith.constant 0 : i32
    %c0_i32_0 = arith.constant 0 : i32
    %c0_i32_1 = arith.constant 0 : i32
    return %c0_i32, %c0_i32_0 : i32, i32
  }
  func.func @transform_2(%arg0: i32, %arg1: i32) -> (i32, i32, i32) {
    %c0_i32 = arith.constant 0 : i32
    %c0_i32_0 = arith.constant 0 : i32
    return %arg0, %arg1, %c0_i32 : i32, i32, i32
  }
  func.func @transform_3(%arg0: i32, %arg1: i32) -> (i32, i32, i32) {
    %c0_i32 = arith.constant 0 : i32
    %c0_i32_0 = arith.constant 0 : i32
    return %arg0, %arg1, %c0_i32 : i32, i32, i32
  }
  func.func @transform_4(%arg0: i32, %arg1: i32) -> (i32, i32, i32) {
    %c0_i32 = arith.constant 0 : i32
    %c0_i32_0 = arith.constant 0 : i32
    return %arg0, %arg1, %c0_i32 : i32, i32, i32
  }
}

</mosaic_0001>

<llo_original>
// kernel: tpu_custom_call.1
$region0: #{tpu_custom_call.1}
  #allocation0 [shape = 'u32[]', space=smem, size = 0x4, offset = 0x4, fixed_abs, tag = 'smem constant byte address 0x4 - core index']
  #allocation1 [shape = 'u32[144,128]{1,0:T(1,128)}', space=vmem, size = 0x12000, scoped, tag = 'internal scratch']
  %s0 = inlined_call_operand.hbm [shape: bf16[2,8,32], index: 0, kind: input, shape index: {}]
  %s1 = inlined_call_operand.hbm [shape: bf16[32,96], index: 1, kind: input, shape index: {}]
  %s2 = inlined_call_operand.hbm [shape: bf16[2,8,32], index: 2, kind: output, shape index: {0}]
  %s3 = inlined_call_operand.hbm [shape: bf16[2,8,32], index: 3, kind: output, shape index: {1}]
  %s4 = inlined_call_operand.hbm [shape: bf16[2,8,32], index: 4, kind: output, shape index: {2}]
  %5 = xla_tuple %s2, %s3, %s4
  %s6 = sld [smem:[#allocation0]]
  $region65: #{tpu_custom_call.1} parent=0
    _
  %s8 = ssub.s32 1, %s6
  %s9 = scalar_select 0, %s8, %s6
  $region1: #{tpu_custom_call.1} parent=0
    #allocation2 [shape = 'u8[4096]{0}', space=vmem, size = 0x1000, scoped, tag = 'input window, operand 0']
    #allocation3 [shape = 's32[2]{0}', space=sflag, size = 0x8, scoped, tag = 'scoped memory for tpu_custom_call.1']
    #allocation4 [shape = 's32[2]{0}', space=sflag, size = 0x8, scoped, tag = 'scoped memory for tpu_custom_call.1']
    #allocation5 [shape = 'u8[8192]{0}', space=vmem, size = 0x2000, scoped, tag = 'input window, operand 1, single buffered']
    #allocation6 [shape = 's32[1]{0}', space=sflag, size = 0x4, scoped, tag = 'scoped memory for tpu_custom_call.1']
    #allocation7 [shape = 'u8[4096]{0}', space=vmem, size = 0x1000, scoped, tag = 'output window, operand 0']
    #allocation8 [shape = 'u8[4096]{0}', space=vmem, size = 0x1000, scoped, tag = 'output window, operand 1']
    #allocation9 [shape = 's32[2]{0}', space=sflag, size = 0x8, scoped, tag = 'scoped memory for tpu_custom_call.1']
    #allocation10 [shape = 'u8[4096]{0}', space=vmem, size = 0x1000, scoped, tag = 'output window, operand 2']
    %10 = vsyncpa [#allocation3], 0
    %s11 = scalar_lea.sflag [#allocation3], 1
    %12 = vsyncpa %s11, 0
    %13 = vsyncpa [#allocation6], 0
    %14 = vsyncpa [#allocation4], 0
    %s15 = scalar_lea.sflag [#allocation4], 1
    %16 = vsyncpa %s15, 0
    %17 = vsyncpa [#allocation9], 0
    %s18 = scalar_lea.sflag [#allocation9], 1
    %19 = vsyncpa %s18, 0
    loop: start=0, step=1, limit=4
    $region2: #{tpu_custom_call.1} parent=1 // loop_pre_header
      _
    $region3: #{tpu_custom_call.1} parent=1 // loop_header
      %s21 = sphi 0, %s25
      %p22 = scmp.ge.s32.totalorder %s21, 4
      %s28 = sphi 0, %s40
      %s29 = sphi 0, %s36
      %s30 = sphi 0, %s28
      %s31 = sphi 0, %s29
      %s32 = sphi 0, %s30
      %s33 = sphi 0, %s31
      %s45 = sphi 0, %s47
      %s48 = sphi 0, %s45
      %s49 = sphi 0, %s48
      %s65 = sphi 0, %s49
      %s69 = sphi 0, %s69
      %s71 = sphi 0, %s69
      %s72 = sphi 0, %s71
      %s86 = sphi 0, %s72
      %s94 = sphi 0, %s96
      %s97 = sphi 0, %s94
      %s98 = sphi 0, %s97
      %s114 = sphi 0, %s98
      %s122 = sphi 0, %s124
      %s125 = sphi 0, %s122
      %s126 = sphi 0, %s125
      %s142 = sphi 0, %s126
      %s150 = sphi 0, %s152
      %s153 = sphi 0, %s150
      %s154 = sphi 0, %s153
      %s170 = sphi 0, %s154
    $region4: #{tpu_custom_call.1} parent=1 // loop_header_branch
      %24 = sbr.rel (%p22) target = $region8
    $region5: #{tpu_custom_call.1} parent=1 // loop_body
      %s26 = ssub.s32 %s21, 1
      %s27 = ssub.s32 %s21, 2
      %s34 = sadd.s32 1, %s29
      %p35 = scmp.ge.s32.totalorder %s34, 1
      %s36 = scalar_select %p35, 0, %s34
      %s37 = sadd.s32 1, %s28
      %s38 = scalar_select %p35, %s37, %s28
      %p39 = scmp.ge.s32.totalorder %s38, 2
      %s40 = scalar_select %p39, 0, %s38
      %s41 = ssub.s32 %s28, %s40
      %s42 = ssub.s32 %s29, %s36
      %s43 = sor.u32 %s41, %s42
      %p44 = scmp.eq.s32.totalorder %s43, 0
      %s46 = sadd.s32 %s45, 1
      %s47 = scalar_select %p44, %s45, %s46
      %p50 = pneg %p44
      %p51 = scmp.eq.s32.totalorder %s21, 1
      %p52 = por %p50, %p51
      %p53 = scmp.ne.s32.totalorder %s45, %s48
      %p54 = scmp.eq.s32.totalorder %s21, 0
      %p55 = por %p53, %p54
      %p56 = scmp.ne.s32.totalorder %s45, %s48
      %p57 = scmp.eq.s32.totalorder %s26, 1
      %p58 = por %p56, %p57
      %p59 = scmp.ne.s32.totalorder %s48, %s49
      %p60 = scmp.eq.s32.totalorder %s26, 0
      %p61 = por %p59, %p60
      %p62 = scmp.ne.s32.totalorder %s48, %s49
      %p63 = scmp.eq.s32.totalorder %s27, 1
      %p64 = por %p62, %p63
      %p66 = scmp.ne.s32.totalorder %s49, %s65
      %p67 = scmp.eq.s32.totalorder %s27, 0
      %p68 = por %p66, %p67
      %s70 = sadd.s32 %s69, 1
      %p73 = scmp.eq.s32.totalorder %s21, 1
      %p74 = scmp.ne.s32.totalorder %s69, %s71
      %p75 = scmp.eq.s32.totalorder %s21, 0
      %p76 = por %p74, %p75
      %p77 = scmp.ne.s32.totalorder %s69, %s71
      %p78 = scmp.eq.s32.totalorder %s26, 1
      %p79 = por %p77, %p78
      %p80 = scmp.ne.s32.totalorder %s71, %s72
      %p81 = scmp.eq.s32.totalorder %s26, 0
      %p82 = por %p80, %p81
      %p83 = scmp.ne.s32.totalorder %s71, %s72
      %p84 = scmp.eq.s32.totalorder %s27, 1
      %p85 = por %p83, %p84
      %p87 = scmp.ne.s32.totalorder %s72, %s86
      %p88 = scmp.eq.s32.totalorder %s27, 0
      %p89 = por %p87, %p88
      %s90 = ssub.s32 %s28, %s40
      %s91 = ssub.s32 %s29, %s36
      %s92 = sor.u32 %s90, %s91
      %p93 = scmp.eq.s32.totalorder %s92, 0
      %s95 = sadd.s32 %s94, 1
      %s96 = scalar_select %p93, %s94, %s95
      %p99 = pneg %p93
      %p100 = scmp.eq.s32.totalorder %s21, 1
      %p101 = por %p99, %p100
      %p102 = scmp.ne.s32.totalorder %s94, %s97
      %p103 = scmp.eq.s32.totalorder %s21, 0
      %p104 = por %p102, %p103
      %p105 = scmp.ne.s32.totalorder %s94, %s97
      %p106 = scmp.eq.s32.totalorder %s26, 1
      %p107 = por %p105, %p106
      %p108 = scmp.ne.s32.totalorder %s97, %s98
      %p109 = scmp.eq.s32.totalorder %s26, 0
      %p110 = por %p108, %p109
      %p111 = scmp.ne.s32.totalorder %s97, %s98
      %p112 = scmp.eq.s32.totalorder %s27, 1
      %p113 = por %p111, %p112
      %p115 = scmp.ne.s32.totalorder %s98, %s114
      %p116 = scmp.eq.s32.totalorder %s27, 0
      %p117 = por %p115, %p116
      %s118 = ssub.s32 %s28, %s40
      %s119 = ssub.s32 %s29, %s36
      %s120 = sor.u32 %s118, %s119
      %p121 = scmp.eq.s32.totalorder %s120, 0
      %s123 = sadd.s32 %s122, 1
      %s124 = scalar_select %p121, %s122, %s123
      %p127 = pneg %p121
      %p128 = scmp.eq.s32.totalorder %s21, 1
      %p129 = por %p127, %p128
      %p130 = scmp.ne.s32.totalorder %s122, %s125
      %p131 = scmp.eq.s32.totalorder %s21, 0
      %p132 = por %p130, %p131
      %p133 = scmp.ne.s32.totalorder %s122, %s125
      %p134 = scmp.eq.s32.totalorder %s26, 1
      %p135 = por %p133, %p134
      %p136 = scmp.ne.s32.totalorder %s125, %s126
      %p137 = scmp.eq.s32.totalorder %s26, 0
      %p138 = por %p136, %p137
      %p139 = scmp.ne.s32.totalorder %s125, %s126
      %p140 = scmp.eq.s32.totalorder %s27, 1
      %p141 = por %p139, %p140
      %p143 = scmp.ne.s32.totalorder %s126, %s142
      %p144 = scmp.eq.s32.totalorder %s27, 0
      %p145 = por %p143, %p144
      %s146 = ssub.s32 %s28, %s40
      %s147 = ssub.s32 %s29, %s36
      %s148 = sor.u32 %s146, %s147
      %p149 = scmp.eq.s32.totalorder %s148, 0
      %s151 = sadd.s32 %s150, 1
      %s152 = scalar_select %p149, %s150, %s151
      %p155 = pneg %p149
      %p156 = scmp.eq.s32.totalorder %s21, 1
      %p157 = por %p155, %p156
      %p158 = scmp.ne.s32.totalorder %s150, %s153
      %p159 = scmp.eq.s32.totalorder %s21, 0
      %p160 = por %p158, %p159
      %p161 = scmp.ne.s32.totalorder %s150, %s153
      %p162 = scmp.eq.s32.totalorder %s26, 1
      %p163 = por %p161, %p162
      %p164 = scmp.ne.s32.totalorder %s153, %s154
      %p165 = scmp.eq.s32.totalorder %s26, 0
      %p166 = por %p164, %p165
      %p167 = scmp.ne.s32.totalorder %s153, %s154
      %p168 = scmp.eq.s32.totalorder %s27, 1
      %p169 = por %p167, %p168
      %p171 = scmp.ne.s32.totalorder %s154, %s170
      %p172 = scmp.eq.s32.totalorder %s27, 0
      %p173 = por %p171, %p172
      %p174 = scmp.le.s32.totalorder 1, %s21
      %p175 = scmp.lt.s32.totalorder %s21, 3
      %p176 = pnand %p174, %p175
      %p177 = pneg %p176
      // Predicated region
      $region9: #{tpu_custom_call.1} parent=5 // pred_check
        _
      $region10: #{tpu_custom_call.1} parent=5 // pred_check_branch
        %179 = sbr.rel (%p176) target = $region12
      $region11: #{tpu_custom_call.1} parent=5 // pred_region
        %s180 = ssub.s32 %s21, 1
        // Predicated region
        $region13: #{tpu_custom_call.1} parent=11 // pred_check
          %p181 = pneg %p82
        $region14: #{tpu_custom_call.1} parent=11 // pred_check_branch
          %183 = sbr.rel (%p181) target = $region16
        $region15: #{tpu_custom_call.1} parent=11 // pred_region
          %s185 = ssub.s32 256, 256
          %186 = vsyncadd [#allocation6], %s185
          %s187 = sshll.u32 [#allocation5], 4
          %s188 = int_to_ptr.vmem [resolvable:$true] %s187
          %193 = dma.hbm_to_vmem [thread:$0]  %s1, 256, %s188, [#allocation6], 64, 64, 4
        $region16: #{tpu_custom_call.1} parent=11 // pred_fallthru
          _
      $region12: #{tpu_custom_call.1} parent=5 // pred_fallthru
        _
      %p194 = scmp.lt.s32.totalorder %s21, 2
      // Predicated region
      $region17: #{tpu_custom_call.1} parent=5 // pred_check
        %p195 = pneg %p194
      $region18: #{tpu_custom_call.1} parent=5 // pred_check_branch
        %197 = sbr.rel (%p195) target = $region20
      $region19: #{tpu_custom_call.1} parent=5 // pred_region
        // Predicated region
        $region21: #{tpu_custom_call.1} parent=19 // pred_check
          %p198 = pneg %p55
        $region22: #{tpu_custom_call.1} parent=19 // pred_check_branch
          %200 = sbr.rel (%p198) target = $region24
        $region23: #{tpu_custom_call.1} parent=19 // pred_region
          %s201 = sand.u32 %s45, 1
          %s202 = scalar_lea.sflag [#allocation3], %s201
          %s203 = sand.u32 %s45, 1
          %s204 = smul.addr %s203, 4
          %s205 = scalar_lea.vmem [#allocation2], %s204
          %s207 = ssub.s32 64, 64
          %208 = vsyncadd %s202, %s207
          %s209 = sadd.s32 %s29, %s28
          %s210 = smul.addr %s209, 64
          %s211 = scalar_lea.hbm %s0, %s210
          %s213 = sshll.u32 %s205, 4
          %s214 = int_to_ptr.vmem [resolvable:$true] %s213
          %216 = dma.hbm_to_vmem [thread:$0]  %s211, 64, %s214, %s202
        $region24: #{tpu_custom_call.1} parent=19 // pred_fallthru
          _
      $region20: #{tpu_custom_call.1} parent=5 // pred_fallthru
        _
      %p217 = scmp.le.s32.totalorder 1, %s21
      %p218 = scmp.lt.s32.totalorder %s21, 3
      %p219 = pnand %p217, %p218
      %p220 = pneg %p219
      // Predicated region
      $region25: #{tpu_custom_call.1} parent=5 // pred_check
        _
      $region26: #{tpu_custom_call.1} parent=5 // pred_check_branch
        %222 = sbr.rel (%p219) target = $region28
      $region27: #{tpu_custom_call.1} parent=5 // pred_region
        %s223 = ssub.s32 %s21, 1
        %s224 = sand.u32 %s48, 1
        %s225 = scalar_lea.sflag [#allocation3], %s224
        %s226 = sand.u32 %s48, 1
        %s227 = smul.addr %s226, 4
        %s228 = scalar_lea.vmem [#allocation2], %s227
        // Predicated region
        $region29: #{tpu_custom_call.1} parent=27 // pred_check
          %p229 = pneg %p61
        $region30: #{tpu_custom_call.1} parent=27 // pred_check_branch
          %231 = sbr.rel (%p229) target = $region32
        $region31: #{tpu_custom_call.1} parent=27 // pred_region
          %232 = dma.done %s225, 64
        $region32: #{tpu_custom_call.1} parent=27 // pred_fallthru
          _
        // Predicated region
        $region33: #{tpu_custom_call.1} parent=27 // pred_check
          %p233 = pneg %p82
        $region34: #{tpu_custom_call.1} parent=27 // pred_check_branch
          %235 = sbr.rel (%p233) target = $region36
        $region35: #{tpu_custom_call.1} parent=27 // pred_region
          %236 = dma.done [#allocation6], 256
        $region36: #{tpu_custom_call.1} parent=27 // pred_fallthru
          _
        %s237 = sand.u32 %s48, 1
        %s238 = scalar_lea.sflag [#allocation3], %s237
        %s239 = sand.u32 %s48, 1
        %s240 = smul.addr %s239, 4
        %s241 = scalar_lea.vmem [#allocation2], %s240
        %p242 = pneg %p61
        %p243 = pneg %p58
        %p244 = pneg %p82
        %p245 = pneg %p79
        %p246 = pneg %p110
        %p247 = pneg %p107
        %s248 = sand.u32 %s97, 1
        %s249 = scalar_lea.sflag [#allocation4], %s248
        %s250 = sand.u32 %s97, 1
        %s251 = smul.addr %s250, 4
        %s252 = scalar_lea.vmem [#allocation7], %s251
        %p253 = pneg %p138
        %p254 = pneg %p135
        %s255 = sand.u32 %s26, 1
        %s256 = scalar_lea.sflag [#allocation9], %s255
        %s257 = sand.u32 %s125, 1
        %s258 = smul.addr %s257, 4
        %s259 = scalar_lea.vmem [#allocation8], %s258
        %p260 = pneg %p166
        %p261 = pneg %p163
        %s262 = sand.u32 %s26, 1
        %s263 = scalar_lea.sflag [#allocation9], %s262
        %s264 = sand.u32 %s153, 1
        %s265 = smul.addr %s264, 4
        %s266 = scalar_lea.vmem [#allocation10], %s265
        %v268 = vld [vmem:[%s228] sm:$0xf]
        %v269 = vld [vmem:[#allocation5] sm:$0xf]
        %v270 = vld [vmem:[#allocation5 + $0x4] sm:$0xf]
        %v271 = vld [vmem:[#allocation5 + $0x8] sm:$0xf]
        %v272 = vld [vmem:[#allocation5 + $0xc] sm:$0xf]
        %v277 = vunpack.c.l.b16 %v269
        %v278 = vunpack.c.l.b16 %v270
        %v279 = vunpack.c.l.b16 %v271
        %v280 = vunpack.c.l.b16 %v272
        %v281 = vpack.c.b16 %v278, %v277
        %v282 = vpack.c.b16 %v280, %v279
        %vm285 = vcmask 261120
        %v287 = vsel %vm285, %v268, 0
        %289 = vmatprep.subr.bf16.mxu0 0
        %290 = vmatpush1.bf16.msra.mxu0 %v281
        %291 = vmatprep.subr.bf16.mxu0 0
        %292 = vmatpush1.bf16.msra.mxu0 %v282
        %293 = vmatprep.subr.bf16.mxu0 0
        %294 = vmatpush1.bf16.msra.mxu0 0
        %295 = vmatprep.subr.bf16.mxu0 0
        %296 = vmatpush1.bf16.msra.mxu0 0
        %297 = vmatprep.subr.bf16.mxu0 0
        %298 = vmatpush1.bf16.msra.mxu0 0
        %299 = vmatprep.subr.bf16.mxu0 0
        %300 = vmatpush1.bf16.msra.mxu0 0
        %301 = vmatprep.subr.bf16.mxu0 0
        %302 = vmatpush1.bf16.msra.mxu0 0
        %303 = vmatprep.subr.bf16.mxu0 0
        %304 = vmatpush1.bf16.msra.mxu0 0
        %305 = vmatprep.subr.bf16.mxu0 0
        %306 = vmatpush1.bf16.msra.mxu0 0
        %307 = vmatprep.subr.bf16.mxu0 0
        %308 = vmatpush1.bf16.msra.mxu0 0
        %309 = vmatprep.subr.bf16.mxu0 0
        %310 = vmatpush1.bf16.msra.mxu0 0
        %311 = vmatprep.subr.bf16.mxu0 0
        %312 = vmatpush1.bf16.msra.mxu0 0
        %313 = vmatprep.subr.bf16.mxu0 0
        %314 = vmatpush1.bf16.msra.mxu0 0
        %315 = vmatprep.subr.bf16.mxu0 0
        %316 = vmatpush1.bf16.msra.mxu0 0
        %317 = vmatprep.subr.bf16.mxu0 0
        %318 = vmatpush1.bf16.msra.mxu0 0
        %319 = vmatprep.subr.bf16.mxu0 0
        %320 = vmatpush1.bf16.msra.mxu0 0
        %321 = vmatprep.mubr.bf16.mxu0 0
        %322 = vmatmul.mubr.bf16.gmra.mrb[0].mxu0 %v287
        %v323 = vpop.f32.mrb[0].mxu0
        %v324 = vadd.f32 0.0, %v323
        %v325 = vpop.f32.mrb[0].mxu0
        %v326 = vpop.f32.mrb[0].mxu0
        %v327 = vpop.f32.mrb[0].mxu0
        %328 = vdwg.mxu0
        %v329 = vmul.f32 %v324, 0.5
        %v330 = vpack.c.bf16 %v329, %v329
        %vm331 = vcmask 257024
        %332 = vst.msk [vmem:[%s252] sm:$0xf] %vm331, %v330
        %v333 = vpack.c.bf16 %v324, %v324
        %v335 = vunpack.c.l.b16 %v333
        %v336 = vpack.c.b16 %v335, %v335
        %337 = vrot.lane.b32.xlu0 %v336, 96
        %v338 = vpop.permute.xlu0 %337
        %340 = vst.msk [vmem:[%s259] sm:$0xf] %vm331, %v338
        %341 = vrot.lane.b32.xlu0 %v336, 64
        %v342 = vpop.permute.xlu0 %341
        %344 = vst.msk [vmem:[%s266] sm:$0xf] %vm331, %v342
        %s345 = sand.u32 %s97, 1
        %s346 = scalar_lea.sflag [#allocation4], %s345
        %s347 = sand.u32 %s97, 1
        %s348 = smul.addr %s347, 4
        %s349 = scalar_lea.vmem [#allocation7], %s348
        %s350 = sand.u32 %s26, 1
        %s351 = scalar_lea.sflag [#allocation9], %s350
        %s352 = sand.u32 %s125, 1
        %s353 = smul.addr %s352, 4
        %s354 = scalar_lea.vmem [#allocation8], %s353
        %s355 = sand.u32 %s26, 1
        %s356 = scalar_lea.sflag [#allocation9], %s355
        %s357 = sand.u32 %s153, 1
        %s358 = smul.addr %s357, 4
        %s359 = scalar_lea.vmem [#allocation10], %s358
        // Predicated region
        $region37: #{tpu_custom_call.1} parent=27 // pred_check
          %p360 = pneg %p107
        $region38: #{tpu_custom_call.1} parent=27 // pred_check_branch
          %362 = sbr.rel (%p360) target = $region40
        $region39: #{tpu_custom_call.1} parent=27 // pred_region
          %s364 = ssub.s32 64, 64
          %365 = vsyncadd %s346, %s364
          %s366 = sadd.s32 %s31, %s30
          %s367 = smul.addr %s366, 64
          %s368 = scalar_lea.hbm %s2, %s367
          %s370 = sshll.u32 %s349, 4
          %s371 = int_to_ptr.vmem [resolvable:$true] %s370
          %373 = dma.vmem_to_hbm [thread:$0]  %s371, 64, %s368, %s346
        $region40: #{tpu_custom_call.1} parent=27 // pred_fallthru
          _
        // Predicated region
        $region41: #{tpu_custom_call.1} parent=27 // pred_check
          %p374 = pneg %p135
        $region42: #{tpu_custom_call.1} parent=27 // pred_check_branch
          %376 = sbr.rel (%p374) target = $region44
        $region43: #{tpu_custom_call.1} parent=27 // pred_region
          %s378 = ssub.s32 64, 64
          %379 = vsyncadd %s351, %s378
          %s380 = sadd.s32 %s31, %s30
          %s381 = smul.addr %s380, 64
          %s382 = scalar_lea.hbm %s3, %s381
          %s384 = sshll.u32 %s354, 4
          %s385 = int_to_ptr.vmem [resolvable:$true] %s384
          %387 = dma.vmem_to_hbm [thread:$0]  %s385, 64, %s382, %s351
        $region44: #{tpu_custom_call.1} parent=27 // pred_fallthru
          _
        // Predicated region
        $region45: #{tpu_custom_call.1} parent=27 // pred_check
          %p388 = pneg %p163
        $region46: #{tpu_custom_call.1} parent=27 // pred_check_branch
          %390 = sbr.rel (%p388) target = $region48
        $region47: #{tpu_custom_call.1} parent=27 // pred_region
          %s392 = ssub.s32 64, 64
          %393 = vsyncadd %s356, %s392
          %s394 = sadd.s32 %s31, %s30
          %s395 = smul.addr %s394, 64
          %s396 = scalar_lea.hbm %s4, %s395
          %s398 = sshll.u32 %s359, 4
          %s399 = int_to_ptr.vmem [resolvable:$true] %s398
          %401 = dma.vmem_to_hbm [thread:$0]  %s399, 64, %s396, %s356
        $region48: #{tpu_custom_call.1} parent=27 // pred_fallthru
          _
      $region28: #{tpu_custom_call.1} parent=5 // pred_fallthru
        _
      %p402 = scmp.le.s32.totalorder 2, %s21
      // Predicated region
      $region49: #{tpu_custom_call.1} parent=5 // pred_check
        %p403 = pneg %p402
      $region50: #{tpu_custom_call.1} parent=5 // pred_check_branch
        %405 = sbr.rel (%p403) target = $region52
      $region51: #{tpu_custom_call.1} parent=5 // pred_region
        %s406 = ssub.s32 %s21, 2
        // Predicated region
        $region53: #{tpu_custom_call.1} parent=51 // pred_check
          %p407 = pneg %p113
        $region54: #{tpu_custom_call.1} parent=51 // pred_check_branch
          %409 = sbr.rel (%p407) target = $region56
        $region55: #{tpu_custom_call.1} parent=51 // pred_region
          %s410 = sand.u32 %s98, 1
          %s411 = scalar_lea.sflag [#allocation4], %s410
          %s412 = sand.u32 %s98, 1
          %s413 = smul.addr %s412, 4
          %s414 = scalar_lea.vmem [#allocation7], %s413
          %415 = dma.done %s411, 64
        $region56: #{tpu_custom_call.1} parent=51 // pred_fallthru
          _
        // Predicated region
        $region57: #{tpu_custom_call.1} parent=51 // pred_check
          %p416 = pneg %p141
        $region58: #{tpu_custom_call.1} parent=51 // pred_check_branch
          %418 = sbr.rel (%p416) target = $region60
        $region59: #{tpu_custom_call.1} parent=51 // pred_region
          %s419 = sand.u32 %s27, 1
          %s420 = scalar_lea.sflag [#allocation9], %s419
          %s421 = sand.u32 %s126, 1
          %s422 = smul.addr %s421, 4
          %s423 = scalar_lea.vmem [#allocation8], %s422
          %424 = dma.done %s420, 64
        $region60: #{tpu_custom_call.1} parent=51 // pred_fallthru
          _
        // Predicated region
        $region61: #{tpu_custom_call.1} parent=51 // pred_check
          %p425 = pneg %p169
        $region62: #{tpu_custom_call.1} parent=51 // pred_check_branch
          %427 = sbr.rel (%p425) target = $region64
        $region63: #{tpu_custom_call.1} parent=51 // pred_region
          %s428 = sand.u32 %s27, 1
          %s429 = scalar_lea.sflag [#allocation9], %s428
          %s430 = sand.u32 %s154, 1
          %s431 = smul.addr %s430, 4
          %s432 = scalar_lea.vmem [#allocation10], %s431
          %433 = dma.done %s429, 64
        $region64: #{tpu_custom_call.1} parent=51 // pred_fallthru
          _
      $region52: #{tpu_custom_call.1} parent=5 // pred_fallthru
        _
    $region6: #{tpu_custom_call.1} parent=1 // loop_footer
      %s25 = sadd.s32 1, %s21
    $region7: #{tpu_custom_call.1} parent=1 // loop_footer_branch
      %20 = sbr.rel target = $region3
    $region8: #{tpu_custom_call.1} parent=1 // loop_exit
      _
    %434 = vsyncpa [#allocation3], 1
    %s435 = scalar_lea.sflag [#allocation3], 1
    %436 = vsyncpa %s435, 1
    %437 = vsyncpa [#allocation6], 1
    %438 = vsyncpa [#allocation4], 1
    %s439 = scalar_lea.sflag [#allocation4], 1
    %440 = vsyncpa %s439, 1
    %441 = vsyncpa [#allocation9], 1
    %s442 = scalar_lea.sflag [#allocation9], 1
    %443 = vsyncpa %s442, 1

// kernel: tpu_custom_call.1
$region0: #{tpu_custom_call.1}
  #allocation0 [shape = 'u32[]', space=smem, size = 0x4, offset = 0x4, fixed_abs, tag = 'smem constant byte address 0x4 - core index']
  #allocation1 [shape = 'u32[144,128]{1,0:T(1,128)}', space=vmem, size = 0x12000, scoped, tag = 'internal scratch']
  %s0 = inlined_call_operand.hbm [shape: bf16[2,8,32], index: 0, kind: input, shape index: {}]
  %s1 = inlined_call_operand.hbm [shape: bf16[32,96], index: 1, kind: input, shape index: {}]
  %s2 = inlined_call_operand.hbm [shape: bf16[2,8,32], index: 2, kind: output, shape index: {0}]
  %s3 = inlined_call_operand.hbm [shape: bf16[2,8,32], index: 3, kind: output, shape index: {1}]
  %s4 = inlined_call_operand.hbm [shape: bf16[2,8,32], index: 4, kind: output, shape index: {2}]
  %5 = xla_tuple %s2, %s3, %s4
  %s6 = sld [smem:[#allocation0]]
  $region65: #{tpu_custom_call.1} parent=0
    _
  %s8 = ssub.s32 1, %s6
  %s9 = scalar_select 0, %s8, %s6
  $region1: #{tpu_custom_call.1} parent=0
    #allocation2 [shape = 'u8[4096]{0}', space=vmem, size = 0x1000, scoped, tag = 'input window, operand 0']
    #allocation3 [shape = 's32[2]{0}', space=sflag, size = 0x8, scoped, tag = 'scoped memory for tpu_custom_call.1']
    #allocation4 [shape = 's32[2]{0}', space=sflag, size = 0x8, scoped, tag = 'scoped memory for tpu_custom_call.1']
    #allocation5 [shape = 'u8[8192]{0}', space=vmem, size = 0x2000, scoped, tag = 'input window, operand 1, single buffered']
    #allocation6 [shape = 's32[1]{0}', space=sflag, size = 0x4, scoped, tag = 'scoped memory for tpu_custom_call.1']
    #allocation7 [shape = 'u8[4096]{0}', space=vmem, size = 0x1000, scoped, tag = 'output window, operand 0']
    #allocation8 [shape = 'u8[4096]{0}', space=vmem, size = 0x1000, scoped, tag = 'output window, operand 1']
    #allocation9 [shape = 's32[2]{0}', space=sflag, size = 0x8, scoped, tag = 'scoped memory for tpu_custom_call.1']
    #allocation10 [shape = 'u8[4096]{0}', space=vmem, size = 0x1000, scoped, tag = 'output window, operand 2']
    %10 = vsyncpa [#allocation3], 0
    %s11 = scalar_lea.sflag [#allocation3], 1
    %12 = vsyncpa %s11, 0
    %13 = vsyncpa [#allocation6], 0
    %14 = vsyncpa [#allocation4], 0
    %s15 = scalar_lea.sflag [#allocation4], 1
    %16 = vsyncpa %s15, 0
    %17 = vsyncpa [#allocation9], 0
    %s18 = scalar_lea.sflag [#allocation9], 1
    %19 = vsyncpa %s18, 0
    loop: start=0, step=1, limit=4
    $region2: #{tpu_custom_call.1} parent=1 // loop_pre_header
      _
    $region3: #{tpu_custom_call.1} parent=1 // loop_header
      %s21 = sphi 0, %s25
      %p22 = scmp.ge.s32.totalorder %s21, 4
      %s28 = sphi 0, %s40
      %s29 = sphi 0, %s36
      %s30 = sphi 0, %s28
      %s31 = sphi 0, %s29
      %s32 = sphi 0, %s30
      %s33 = sphi 0, %s31
      %s45 = sphi 0, %s47
      %s48 = sphi 0, %s45
      %s49 = sphi 0, %s48
      %s65 = sphi 0, %s49
      %s69 = sphi 0, %s69
      %s71 = sphi 0, %s69
      %s72 = sphi 0, %s71
      %s86 = sphi 0, %s72
      %s94 = sphi 0, %s96
      %s97 = sphi 0, %s94
      %s98 = sphi 0, %s97
      %s114 = sphi 0, %s98
      %s122 = sphi 0, %s124
      %s125 = sphi 0, %s122
      %s126 = sphi 0, %s125
      %s142 = sphi 0, %s126
      %s150 = sphi 0, %s152
      %s153 = sphi 0, %s150
      %s154 = sphi 0, %s153
      %s170 = sphi 0, %s154
    $region4: #{tpu_custom_call.1} parent=1 // loop_header_branch
      %24 = sbr.rel (%p22) target = $region8
    $region5: #{tpu_custom_call.1} parent=1 // loop_body
      %s26 = ssub.s32 %s21, 1
      %s27 = ssub.s32 %s21, 2
      %s34 = sadd.s32 1, %s29
      %p35 = scmp.ge.s32.totalorder %s34, 1
      %s36 = scalar_select %p35, 0, %s34
      %s37 = sadd.s32 1, %s28
      %s38 = scalar_select %p35, %s37, %s28
      %p39 = scmp.ge.s32.totalorder %s38, 2
      %s40 = scalar_select %p39, 0, %s38
      %s41 = ssub.s32 %s28, %s40
      %s42 = ssub.s32 %s29, %s36
      %s43 = sor.u32 %s41, %s42
      %p44 = scmp.eq.s32.totalorder %s43, 0
      %s46 = sadd.s32 %s45, 1
      %s47 = scalar_select %p44, %s45, %s46
      %p50 = pneg %p44
      %p51 = scmp.eq.s32.totalorder %s21, 1
      %p52 = por %p50, %p51
      %p53 = scmp.ne.s32.totalorder %s45, %s48
      %p54 = scmp.eq.s32.totalorder %s21, 0
      %p55 = por %p53, %p54
      %p56 = scmp.ne.s32.totalorder %s45, %s48
      %p57 = scmp.eq.s32.totalorder %s26, 1
      %p58 = por %p56, %p57
      %p59 = scmp.ne.s32.totalorder %s48, %s49
      %p60 = scmp.eq.s32.totalorder %s26, 0
      %p61 = por %p59, %p60
      %p62 = scmp.ne.s32.totalorder %s48, %s49
      %p63 = scmp.eq.s32.totalorder %s27, 1
      %p64 = por %p62, %p63
      %p66 = scmp.ne.s32.totalorder %s49, %s65
      %p67 = scmp.eq.s32.totalorder %s27, 0
      %p68 = por %p66, %p67
      %s70 = sadd.s32 %s69, 1
      %p73 = scmp.eq.s32.totalorder %s21, 1
      %p74 = scmp.ne.s32.totalorder %s69, %s71
      %p75 = scmp.eq.s32.totalorder %s21, 0
      %p76 = por %p74, %p75
      %p77 = scmp.ne.s32.totalorder %s69, %s71
      %p78 = scmp.eq.s32.totalorder %s26, 1
      %p79 = por %p77, %p78
      %p80 = scmp.ne.s32.totalorder %s71, %s72
      %p81 = scmp.eq.s32.totalorder %s26, 0
      %p82 = por %p80, %p81
      %p83 = scmp.ne.s32.totalorder %s71, %s72
      %p84 = scmp.eq.s32.totalorder %s27, 1
      %p85 = por %p83, %p84
      %p87 = scmp.ne.s32.totalorder %s72, %s86
      %p88 = scmp.eq.s32.totalorder %s27, 0
      %p89 = por %p87, %p88
      %s90 = ssub.s32 %s28, %s40
      %s91 = ssub.s32 %s29, %s36
      %s92 = sor.u32 %s90, %s91
      %p93 = scmp.eq.s32.totalorder %s92, 0
      %s95 = sadd.s32 %s94, 1
      %s96 = scalar_select %p93, %s94, %s95
      %p99 = pneg %p93
      %p100 = scmp.eq.s32.totalorder %s21, 1
      %p101 = por %p99, %p100
      %p102 = scmp.ne.s32.totalorder %s94, %s97
      %p103 = scmp.eq.s32.totalorder %s21, 0
      %p104 = por %p102, %p103
      %p105 = scmp.ne.s32.totalorder %s94, %s97
      %p106 = scmp.eq.s32.totalorder %s26, 1
      %p107 = por %p105, %p106
      %p108 = scmp.ne.s32.totalorder %s97, %s98
      %p109 = scmp.eq.s32.totalorder %s26, 0
      %p110 = por %p108, %p109
      %p111 = scmp.ne.s32.totalorder %s97, %s98
      %p112 = scmp.eq.s32.totalorder %s27, 1
      %p113 = por %p111, %p112
      %p115 = scmp.ne.s32.totalorder %s98, %s114
      %p116 = scmp.eq.s32.totalorder %s27, 0
      %p117 = por %p115, %p116
      %s118 = ssub.s32 %s28, %s40
      %s119 = ssub.s32 %s29, %s36
      %s120 = sor.u32 %s118, %s119
      %p121 = scmp.eq.s32.totalorder %s120, 0
      %s123 = sadd.s32 %s122, 1
      %s124 = scalar_select %p121, %s122, %s123
      %p127 = pneg %p121
      %p128 = scmp.eq.s32.totalorder %s21, 1
      %p129 = por %p127, %p128
      %p130 = scmp.ne.s32.totalorder %s122, %s125
      %p131 = scmp.eq.s32.totalorder %s21, 0
      %p132 = por %p130, %p131
      %p133 = scmp.ne.s32.totalorder %s122, %s125
      %p134 = scmp.eq.s32.totalorder %s26, 1
      %p135 = por %p133, %p134
      %p136 = scmp.ne.s32.totalorder %s125, %s126
      %p137 = scmp.eq.s32.totalorder %s26, 0
      %p138 = por %p136, %p137
      %p139 = scmp.ne.s32.totalorder %s125, %s126
      %p140 = scmp.eq.s32.totalorder %s27, 1
      %p141 = por %p139, %p140
      %p143 = scmp.ne.s32.totalorder %s126, %s142
      %p144 = scmp.eq.s32.totalorder %s27, 0
      %p145 = por %p143, %p144
      %s146 = ssub.s32 %s28, %s40
      %s147 = ssub.s32 %s29, %s36
      %s148 = sor.u32 %s146, %s147
      %p149 = scmp.eq.s32.totalorder %s148, 0
      %s151 = sadd.s32 %s150, 1
      %s152 = scalar_select %p149, %s150, %s151
      %p155 = pneg %p149
      %p156 = scmp.eq.s32.totalorder %s21, 1
      %p157 = por %p155, %p156
      %p158 = scmp.ne.s32.totalorder %s150, %s153
      %p159 = scmp.eq.s32.totalorder %s21, 0
      %p160 = por %p158, %p159
      %p161 = scmp.ne.s32.totalorder %s150, %s153
      %p162 = scmp.eq.s32.totalorder %s26, 1
      %p163 = por %p161, %p162
      %p164 = scmp.ne.s32.totalorder %s153, %s154
      %p165 = scmp.eq.s32.totalorder %s26, 0
      %p166 = por %p164, %p165
      %p167 = scmp.ne.s32.totalorder %s153, %s154
      %p168 = scmp.eq.s32.totalorder %s27, 1
      %p169 = por %p167, %p168
      %p171 = scmp.ne.s32.totalorder %s154, %s170
      %p172 = scmp.eq.s32.totalorder %s27, 0
      %p173 = por %p171, %p172
      %p174 = scmp.le.s32.totalorder 1, %s21
      %p175 = scmp.lt.s32.totalorder %s21, 3
      %p176 = pnand %p174, %p175
      %p177 = pneg %p176
      // Predicated region
      $region9: #{tpu_custom_call.1} parent=5 // pred_check
        _
      $region10: #{tpu_custom_call.1} parent=5 // pred_check_branch
        %179 = sbr.rel (%p176) target = $region12
      $region11: #{tpu_custom_call.1} parent=5 // pred_region
        %s180 = ssub.s32 %s21, 1
        // Predicated region
        $region13: #{tpu_custom_call.1} parent=11 // pred_check
          %p181 = pneg %p82
        $region14: #{tpu_custom_call.1} parent=11 // pred_check_branch
          %183 = sbr.rel (%p181) target = $region16
        $region15: #{tpu_custom_call.1} parent=11 // pred_region
          %s185 = ssub.s32 256, 256
          %186 = vsyncadd [#allocation6], %s185
          %s187 = sshll.u32 [#allocation5], 4
          %s188 = int_to_ptr.vmem [resolvable:$true] %s187
          %193 = dma.hbm_to_vmem [thread:$0]  %s1, 256, %s188, [#allocation6], 64, 64, 4
        $region16: #{tpu_custom_call.1} parent=11 // pred_fallthru
          _
      $region12: #{tpu_custom_call.1} parent=5 // pred_fallthru
        _
      %p194 = scmp.lt.s32.totalorder %s21, 2
      // Predicated region
      $region17: #{tpu_custom_call.1} parent=5 // pred_check
        %p195 = pneg %p194
      $region18: #{tpu_custom_call.1} parent=5 // pred_check_branch
        %197 = sbr.rel (%p195) target = $region20
      $region19: #{tpu_custom_call.1} parent=5 // pred_region
        // Predicated region
        $region21: #{tpu_custom_call.1} parent=19 // pred_check
          %p198 = pneg %p55
        $region22: #{tpu_custom_call.1} parent=19 // pred_check_branch
          %200 = sbr.rel (%p198) target = $region24
        $region23: #{tpu_custom_call.1} parent=19 // pred_region
          %s201 = sand.u32 %s45, 1
          %s202 = scalar_lea.sflag [#allocation3], %s201
          %s203 = sand.u32 %s45, 1
          %s204 = smul.addr %s203, 4
          %s205 = scalar_lea.vmem [#allocation2], %s204
          %s207 = ssub.s32 64, 64
          %208 = vsyncadd %s202, %s207
          %s209 = sadd.s32 %s29, %s28
          %s210 = smul.addr %s209, 64
          %s211 = scalar_lea.hbm %s0, %s210
          %s213 = sshll.u32 %s205, 4
          %s214 = int_to_ptr.vmem [resolvable:$true] %s213
          %216 = dma.hbm_to_vmem [thread:$0]  %s211, 64, %s214, %s202
        $region24: #{tpu_custom_call.1} parent=19 // pred_fallthru
          _
      $region20: #{tpu_custom_call.1} parent=5 // pred_fallthru
        _
      %p217 = scmp.le.s32.totalorder 1, %s21
      %p218 = scmp.lt.s32.totalorder %s21, 3
      %p219 = pnand %p217, %p218
      %p220 = pneg %p219
      // Predicated region
      $region25: #{tpu_custom_call.1} parent=5 // pred_check
        _
      $region26: #{tpu_custom_call.1} parent=5 // pred_check_branch
        %222 = sbr.rel (%p219) target = $region28
      $region27: #{tpu_custom_call.1} parent=5 // pred_region
        %s223 = ssub.s32 %s21, 1
        %s224 = sand.u32 %s48, 1
        %s225 = scalar_lea.sflag [#allocation3], %s224
        %s226 = sand.u32 %s48, 1
        %s227 = smul.addr %s226, 4
        %s228 = scalar_lea.vmem [#allocation2], %s227
        // Predicated region
        $region29: #{tpu_custom_call.1} parent=27 // pred_check
          %p229 = pneg %p61
        $region30: #{tpu_custom_call.1} parent=27 // pred_check_branch
          %231 = sbr.rel (%p229) target = $region32
        $region31: #{tpu_custom_call.1} parent=27 // pred_region
          %232 = dma.done %s225, 64
        $region32: #{tpu_custom_call.1} parent=27 // pred_fallthru
          _
        // Predicated region
        $region33: #{tpu_custom_call.1} parent=27 // pred_check
          %p233 = pneg %p82
        $region34: #{tpu_custom_call.1} parent=27 // pred_check_branch
          %235 = sbr.rel (%p233) target = $region36
        $region35: #{tpu_custom_call.1} parent=27 // pred_region
          %236 = dma.done [#allocation6], 256
        $region36: #{tpu_custom_call.1} parent=27 // pred_fallthru
          _
        %s237 = sand.u32 %s48, 1
        %s238 = scalar_lea.sflag [#allocation3], %s237
        %s239 = sand.u32 %s48, 1
        %s240 = smul.addr %s239, 4
        %s241 = scalar_lea.vmem [#allocation2], %s240
        %p242 = pneg %p61
        %p243 = pneg %p58
        %p244 = pneg %p82
        %p245 = pneg %p79
        %p246 = pneg %p110
        %p247 = pneg %p107
        %s248 = sand.u32 %s97, 1
        %s249 = scalar_lea.sflag [#allocation4], %s248
        %s250 = sand.u32 %s97, 1
        %s251 = smul.addr %s250, 4
        %s252 = scalar_lea.vmem [#allocation7], %s251
        %p253 = pneg %p138
        %p254 = pneg %p135
        %s255 = sand.u32 %s26, 1
        %s256 = scalar_lea.sflag [#allocation9], %s255
        %s257 = sand.u32 %s125, 1
        %s258 = smul.addr %s257, 4
        %s259 = scalar_lea.vmem [#allocation8], %s258
        %p260 = pneg %p166
        %p261 = pneg %p163
        %s262 = sand.u32 %s26, 1
        %s263 = scalar_lea.sflag [#allocation9], %s262
        %s264 = sand.u32 %s153, 1
        %s265 = smul.addr %s264, 4
        %s266 = scalar_lea.vmem [#allocation10], %s265
        %v268 = vld [vmem:[%s228] sm:$0xf]
        %v269 = vld [vmem:[#allocation5] sm:$0xf]
        %v270 = vld [vmem:[#allocation5 + $0x4] sm:$0xf]
        %v271 = vld [vmem:[#allocation5 + $0x8] sm:$0xf]
        %v272 = vld [vmem:[#allocation5 + $0xc] sm:$0xf]
        %v277 = vunpack.c.l.b16 %v269
        %v278 = vunpack.c.l.b16 %v270
        %v279 = vunpack.c.l.b16 %v271
        %v280 = vunpack.c.l.b16 %v272
        %v281 = vpack.c.b16 %v278, %v277
        %v282 = vpack.c.b16 %v280, %v279
        %vm285 = vcmask 261120
        %v287 = vsel %vm285, %v268, 0
        %289 = vmatprep.subr.bf16.mxu0 0
        %290 = vmatpush1.bf16.msra.mxu0 %v281
        %291 = vmatprep.subr.bf16.mxu0 0
        %292 = vmatpush1.bf16.msra.mxu0 %v282
        %293 = vmatprep.subr.bf16.mxu0 0
        %294 = vmatpush1.bf16.msra.mxu0 0
        %295 = vmatprep.subr.bf16.mxu0 0
        %296 = vmatpush1.bf16.msra.mxu0 0
        %297 = vmatprep.subr.bf16.mxu0 0
        %298 = vmatpush1.bf16.msra.mxu0 0
        %299 = vmatprep.subr.bf16.mxu0 0
        %300 = vmatpush1.bf16.msra.mxu0 0
        %301 = vmatprep.subr.bf16.mxu0 0
        %302 = vmatpush1.bf16.msra.mxu0 0
        %303 = vmatprep.subr.bf16.mxu0 0
        %304 = vmatpush1.bf16.msra.mxu0 0
        %305 = vmatprep.subr.bf16.mxu0 0
        %306 = vmatpush1.bf16.msra.mxu0 0
        %307 = vmatprep.subr.bf16.mxu0 0
        %308 = vmatpush1.bf16.msra.mxu0 0
        %309 = vmatprep.subr.bf16.mxu0 0
        %310 = vmatpush1.bf16.msra.mxu0 0
        %311 = vmatprep.subr.bf16.mxu0 0
        %312 = vmatpush1.bf16.msra.mxu0 0
        %313 = vmatprep.subr.bf16.mxu0 0
        %314 = vmatpush1.bf16.msra.mxu0 0
        %315 = vmatprep.subr.bf16.mxu0 0
        %316 = vmatpush1.bf16.msra.mxu0 0
        %317 = vmatprep.subr.bf16.mxu0 0
        %318 = vmatpush1.bf16.msra.mxu0 0
        %319 = vmatprep.subr.bf16.mxu0 0
        %320 = vmatpush1.bf16.msra.mxu0 0
        %321 = vmatprep.mubr.bf16.mxu0 0
        %322 = vmatmul.mubr.bf16.gmra.mrb[0].mxu0 %v287
        %v323 = vpop.f32.mrb[0].mxu0
        %v324 = vadd.f32 0.0, %v323
        %v325 = vpop.f32.mrb[0].mxu0
        %v326 = vpop.f32.mrb[0].mxu0
        %v327 = vpop.f32.mrb[0].mxu0
        %328 = vdwg.mxu0
        %v329 = vmul.f32 %v324, 0.5
        %v330 = vpack.c.bf16 %v329, %v329
        %vm331 = vcmask 257024
        %332 = vst.msk [vmem:[%s252] sm:$0xf] %vm331, %v330
        %v333 = vpack.c.bf16 %v324, %v324
        %v335 = vunpack.c.l.b16 %v333
        %v336 = vpack.c.b16 %v335, %v335
        %337 = vrot.lane.b32.xlu0 %v336, 96
        %v338 = vpop.permute.xlu0 %337
        %340 = vst.msk [vmem:[%s259] sm:$0xf] %vm331, %v338
        %341 = vrot.lane.b32.xlu0 %v336, 64
        %v342 = vpop.permute.xlu0 %341
        %344 = vst.msk [vmem:[%s266] sm:$0xf] %vm331, %v342
        %s345 = sand.u32 %s97, 1
        %s346 = scalar_lea.sflag [#allocation4], %s345
        %s347 = sand.u32 %s97, 1
        %s348 = smul.addr %s347, 4
        %s349 = scalar_lea.vmem [#allocation7], %s348
        %s350 = sand.u32 %s26, 1
        %s351 = scalar_lea.sflag [#allocation9], %s350
        %s352 = sand.u32 %s125, 1
        %s353 = smul.addr %s352, 4
        %s354 = scalar_lea.vmem [#allocation8], %s353
        %s355 = sand.u32 %s26, 1
        %s356 = scalar_lea.sflag [#allocation9], %s355
        %s357 = sand.u32 %s153, 1
        %s358 = smul.addr %s357, 4
        %s359 = scalar_lea.vmem [#allocation10], %s358
        // Predicated region
        $region37: #{tpu_custom_call.1} parent=27 // pred_check
          %p360 = pneg %p107
        $region38: #{tpu_custom_call.1} parent=27 // pred_check_branch
          %362 = sbr.rel (%p360) target = $region40
        $region39: #{tpu_custom_call.1} parent=27 // pred_region
          %s364 = ssub.s32 64, 64
          %365 = vsyncadd %s346, %s364
          %s366 = sadd.s32 %s31, %s30
          %s367 = smul.addr %s366, 64
          %s368 = scalar_lea.hbm %s2, %s367
          %s370 = sshll.u32 %s349, 4
          %s371 = int_to_ptr.vmem [resolvable:$true] %s370
          %373 = dma.vmem_to_hbm [thread:$0]  %s371, 64, %s368, %s346
        $region40: #{tpu_custom_call.1} parent=27 // pred_fallthru
          _
        // Predicated region
        $region41: #{tpu_custom_call.1} parent=27 // pred_check
          %p374 = pneg %p135
        $region42: #{tpu_custom_call.1} parent=27 // pred_check_branch
          %376 = sbr.rel (%p374) target = $region44
        $region43: #{tpu_custom_call.1} parent=27 // pred_region
          %s378 = ssub.s32 64, 64
          %379 = vsyncadd %s351, %s378
          %s380 = sadd.s32 %s31, %s30
          %s381 = smul.addr %s380, 64
          %s382 = scalar_lea.hbm %s3, %s381
          %s384 = sshll.u32 %s354, 4
          %s385 = int_to_ptr.vmem [resolvable:$true] %s384
          %387 = dma.vmem_to_hbm [thread:$0]  %s385, 64, %s382, %s351
        $region44: #{tpu_custom_call.1} parent=27 // pred_fallthru
          _
        // Predicated region
        $region45: #{tpu_custom_call.1} parent=27 // pred_check
          %p388 = pneg %p163
        $region46: #{tpu_custom_call.1} parent=27 // pred_check_branch
          %390 = sbr.rel (%p388) target = $region48
        $region47: #{tpu_custom_call.1} parent=27 // pred_region
          %s392 = ssub.s32 64, 64
          %393 = vsyncadd %s356, %s392
          %s394 = sadd.s32 %s31, %s30
          %s395 = smul.addr %s394, 64
          %s396 = scalar_lea.hbm %s4, %s395
          %s398 = sshll.u32 %s359, 4
          %s399 = int_to_ptr.vmem [resolvable:$true] %s398
          %401 = dma.vmem_to_hbm [thread:$0]  %s399, 64, %s396, %s356
        $region48: #{tpu_custom_call.1} parent=27 // pred_fallthru
          _
      $region28: #{tpu_custom_call.1} parent=5 // pred_fallthru
        _
      %p402 = scmp.le.s32.totalorder 2, %s21
      // Predicated region
      $region49: #{tpu_custom_call.1} parent=5 // pred_check
        %p403 = pneg %p402
      $region50: #{tpu_custom_call.1} parent=5 // pred_check_branch
        %405 = sbr.rel (%p403) target = $region52
      $region51: #{tpu_custom_call.1} parent=5 // pred_region
        %s406 = ssub.s32 %s21, 2
        // Predicated region
        $region53: #{tpu_custom_call.1} parent=51 // pred_check
          %p407 = pneg %p113
        $region54: #{tpu_custom_call.1} parent=51 // pred_check_branch
          %409 = sbr.rel (%p407) target = $region56
        $region55: #{tpu_custom_call.1} parent=51 // pred_region
          %s410 = sand.u32 %s98, 1
          %s411 = scalar_lea.sflag [#allocation4], %s410
          %s412 = sand.u32 %s98, 1
          %s413 = smul.addr %s412, 4
          %s414 = scalar_lea.vmem [#allocation7], %s413
          %415 = dma.done %s411, 64
        $region56: #{tpu_custom_call.1} parent=51 // pred_fallthru
          _
        // Predicated region
        $region57: #{tpu_custom_call.1} parent=51 // pred_check
          %p416 = pneg %p141
        $region58: #{tpu_custom_call.1} parent=51 // pred_check_branch
          %418 = sbr.rel (%p416) target = $region60
        $region59: #{tpu_custom_call.1} parent=51 // pred_region
          %s419 = sand.u32 %s27, 1
          %s420 = scalar_lea.sflag [#allocation9], %s419
          %s421 = sand.u32 %s126, 1
          %s422 = smul.addr %s421, 4
          %s423 = scalar_lea.vmem [#allocation8], %s422
          %424 = dma.done %s420, 64
        $region60: #{tpu_custom_call.1} parent=51 // pred_fallthru
          _
        // Predicated region
        $region61: #{tpu_custom_call.1} parent=51 // pred_check
          %p425 = pneg %p169
        $region62: #{tpu_custom_call.1} parent=51 // pred_check_branch
          %427 = sbr.rel (%p425) target = $region64
        $region63: #{tpu_custom_call.1} parent=51 // pred_region
          %s428 = sand.u32 %s27, 1
          %s429 = scalar_lea.sflag [#allocation9], %s428
          %s430 = sand.u32 %s154, 1
          %s431 = smul.addr %s430, 4
          %s432 = scalar_lea.vmem [#allocation10], %s431
          %433 = dma.done %s429, 64
        $region64: #{tpu_custom_call.1} parent=51 // pred_fallthru
          _
      $region52: #{tpu_custom_call.1} parent=5 // pred_fallthru
        _
    $region6: #{tpu_custom_call.1} parent=1 // loop_footer
      %s25 = sadd.s32 1, %s21
    $region7: #{tpu_custom_call.1} parent=1 // loop_footer_branch
      %20 = sbr.rel target = $region3
    $region8: #{tpu_custom_call.1} parent=1 // loop_exit
      _
    %434 = vsyncpa [#allocation3], 1
    %s435 = scalar_lea.sflag [#allocation3], 1
    %436 = vsyncpa %s435, 1
    %437 = vsyncpa [#allocation6], 1
    %438 = vsyncpa [#allocation4], 1
    %s439 = scalar_lea.sflag [#allocation4], 1
    %440 = vsyncpa %s439, 1
    %441 = vsyncpa [#allocation9], 1
    %s442 = scalar_lea.sflag [#allocation9], 1
    %443 = vsyncpa %s442, 1

</llo_original>
